<compile_context>
chip_gen: v5e
topology: v5e:2x2
jax: 0.10.0
libtpu: 0.0.40
codegen_flags: <defaults>
</compile_context>

<pallas_src>
import functools

import jax
import jax.numpy as jnp
from jax.experimental import pallas as pl
from jax.experimental.pallas import tpu as pltpu

LANES = 128
SUBLANES = 8
BLOCK_BYTES = 2 * 1024 * 1024   # target per-input block size (~2 MiB)


def _l1_sum_kernel(p_ref, t_ref, o_ref, acc_ref, *, rows, tm, nb):
    i = pl.program_id(0)

    @pl.when(i == 0)
    def _init():
        acc_ref[...] = jnp.zeros_like(acc_ref)

    # f32 compute is safe on all generations (v5e VPU has no bf16).
    diff = jnp.abs(p_ref[...].astype(jnp.float32) - t_ref[...].astype(jnp.float32))

    def _accumulate(d):
        if tm % SUBLANES == 0:
            # (tm,128) -> (tm//8, 8, 128): trailing dims match the native f32
            # vreg tile, so the reshape is a free regroup and the axis-0 sum is
            # pure VPU adds into the vreg-shaped accumulator.
            acc_ref[...] += d.reshape(tm // SUBLANES, SUBLANES, LANES).sum(axis=0)
        else:
            # Tiny array (< 8 rows): single cross-sublane add into row 0.
            acc_ref[0:1, :] += jnp.sum(d, axis=0, keepdims=True)

    if rows % tm == 0:
        # Every block is full: no masking anywhere.
        _accumulate(diff)
    else:
        # Only the last block can be partial; interior blocks stay unmasked.
        @pl.when(i < nb - 1)
        def _full_block():
            _accumulate(diff)

        @pl.when(i == nb - 1)
        def _partial_block():
            limit = rows - i * tm          # valid rows in this (last) block
            row_idx = jax.lax.broadcasted_iota(jnp.int32, diff.shape, 0)
            # where (select), NOT multiply: stale VMEM rows may hold NaN/Inf.
            _accumulate(jnp.where(row_idx < limit, diff, 0.0))

    @pl.when(i == nb - 1)
    def _finalize():
        # Single cross-sublane (XLU) reduce, once at the end.
        o_ref[...] = jnp.sum(acc_ref[...], axis=0, keepdims=True)


@functools.partial(jax.jit, static_argnames=("loss_weight",))
def l1_loss(pred, target, loss_weight=1.0):
    assert pred.shape == target.shape, "F.l1_loss with default args requires same shape"
    n_elems = pred.size
    if n_elems == 0:
        # torch.nn.functional.l1_loss('mean') on an empty tensor is NaN.
        return jnp.float32(jnp.nan)

    # reshape(-1) of a contiguous array is free (no HBM copy).
    p_flat = pred.reshape(-1)
    t_flat = target.reshape(-1)

    if n_elems % LANES != 0:
        # Ragged size: single fused XLA pass (one read of each input, no
        # prefix-slice copy and no separate tail pass).
        total = jnp.sum(jnp.abs(p_flat.astype(jnp.float32) - t_flat.astype(jnp.float32)))
    else:
        rows = n_elems // LANES
        p2d = p_flat.reshape(rows, LANES)     # free reshape of contiguous data
        t2d = t_flat.reshape(rows, LANES)

        # Dtype-aware row tile: ~2 MiB per input block, multiple of 8 sublanes,
        # never larger than the array (partial last block is masked in-kernel).
        itemsize = max(jnp.dtype(pred.dtype).itemsize, jnp.dtype(target.dtype).itemsize)
        tm_cap = max(SUBLANES, (BLOCK_BYTES // (LANES * itemsize)) // SUBLANES * SUBLANES)
        if rows % SUBLANES == 0:
            tm = min(tm_cap, rows)
        elif rows < SUBLANES:
            tm = rows                          # block spans the full (tiny) array
        else:
            tm = min(tm_cap, (rows // SUBLANES) * SUBLANES)
        nb = (rows + tm - 1) // tm

        in_spec = pl.BlockSpec((tm, LANES), lambda i: (i, 0))

        partial_sums = pl.pallas_call(
            functools.partial(_l1_sum_kernel, rows=rows, tm=tm, nb=nb),
            out_shape=jax.ShapeDtypeStruct((1, LANES), jnp.float32),
            grid=(nb,),
            in_specs=[in_spec, in_spec],
            out_specs=pl.BlockSpec((1, LANES), lambda i: (0, 0)),
            scratch_shapes=[pltpu.VMEM((SUBLANES, LANES), jnp.float32)],
            compiler_params=pltpu.CompilerParams(
                dimension_semantics=("arbitrary",)),
        )(p2d, t2d)

        total = jnp.sum(partial_sums)

    # 1/n in Python float64 (exact for any realistic n), then one f32 scale.
    inv_n = 1.0 / float(n_elems)
    mean = total * jnp.float32(inv_n)
    return (jnp.float32(loss_weight) * mean).astype(jnp.float32)


if __name__ == "__main__":
    key = jax.random.PRNGKey(0)
    k1, k2, k3, k4 = jax.random.split(key, 4)
    loss_weight = 1.0

    # Case 1: small NCHW flow-style tensors, element count divisible by 128
    # (single full block, no masking).
    pred = jax.random.normal(k1, (2, 4, 16, 16), dtype=jnp.float32)
    target = jax.random.normal(k2, (2, 4, 16, 16), dtype=jnp.float32)
    out = jax.block_until_ready(l1_loss(pred, target, loss_weight=loss_weight))
    ref = loss_weight * jnp.mean(jnp.abs(pred - target))
    assert jnp.allclose(out, ref, rtol=1e-6, atol=1e-6), (out, ref)

    # Case 2: divisible by 128 but rows not a multiple of the tile -> exercises
    # the scoped partial-block mask path (20 rows, tm=16, 2 grid steps).
    pred2 = jax.random.normal(k3, (2, 4, 16, 20), dtype=jnp.float32)
    target2 = jax.random.normal(k4, (2, 4, 16, 20), dtype=jnp.float32)
    out2 = jax.block_until_ready(l1_loss(pred2, target2, loss_weight=loss_weight))
    ref2 = loss_weight * jnp.mean(jnp.abs(pred2 - target2))
    assert jnp.allclose(out2, ref2, rtol=1e-6, atol=1e-6), (out2, ref2)

    # Case 3: ragged size (not a multiple of 128) -> fused single-pass fallback.
    pred3 = jax.random.normal(k1, (3, 5, 7), dtype=jnp.float32)
    target3 = jax.random.normal(k2, (3, 5, 7), dtype=jnp.float32)
    out3 = jax.block_until_ready(l1_loss(pred3, target3, loss_weight=loss_weight))
    ref3 = loss_weight * jnp.mean(jnp.abs(pred3 - target3))
    assert jnp.allclose(out3, ref3, rtol=1e-6, atol=1e-6), (out3, ref3)

    print("KERNEL_OK")
</pallas_src>

<mosaic_0001>
module attributes {stable_mosaic.version = 11 : i64} {
  func.func @_l1_sum_kernel(%arg0: i32, %arg1: memref<16x128xf32, #tpu.memory_space<vmem>>, %arg2: memref<16x128xf32, #tpu.memory_space<vmem>>, %arg3: memref<1x128xf32, #tpu.memory_space<vmem>>, %arg4: memref<8x128xf32, #tpu.memory_space<vmem>>) attributes {dimension_semantics = [#tpu.dimension_semantics<arbitrary>], iteration_bounds = array<i64: 1>, scalar_prefetch = 0 : i64, scratch_operands = 1 : i64, tpu.core_type = #tpu.core_type<tc>, window_params = [{transform_indices = @transform_0, window_bounds = array<i64: 16, 128>}, {transform_indices = @transform_1, window_bounds = array<i64: 16, 128>}, {pipeline_mode = #tpu.pipeline_mode<synchronous>, transform_indices = @transform_2, window_bounds = array<i64: 1, 128>}]} {
    %c0_i32 = arith.constant 0 : i32
    %0 = arith.cmpi eq, %arg0, %c0_i32 : i32
    %1 = arith.extui %0 : i1 to i32
    %c0_i32_0 = arith.constant 0 : i32
    %2 = arith.cmpi ne, %1, %c0_i32_0 : i32
    scf.if %2 {
      %cst_10 = arith.constant 0.000000e+00 : f32
      %15 = vector.broadcast %cst_10 : f32 to vector<8x128xf32>
      %c0_11 = arith.constant 0 : index
      %c0_12 = arith.constant 0 : index
      %16 = vector.load %arg4[%c0_11, %c0_12] : memref<8x128xf32, #tpu.memory_space<vmem>>, vector<8x128xf32>
      tpu.vector_store %arg4[%c0_11, %c0_12], %15 {strides = array<i32>} : memref<8x128xf32, #tpu.memory_space<vmem>>, vector<8x128xf32>,
    } else {
    }
    %c0 = arith.constant 0 : index
    %c0_1 = arith.constant 0 : index
    %3 = vector.load %arg1[%c0, %c0_1] : memref<16x128xf32, #tpu.memory_space<vmem>>, vector<16x128xf32>
    %c0_2 = arith.constant 0 : index
    %c0_3 = arith.constant 0 : index
    %4 = vector.load %arg2[%c0_2, %c0_3] : memref<16x128xf32, #tpu.memory_space<vmem>>, vector<16x128xf32>
    %5 = arith.subf %3, %4 : vector<16x128xf32>
    %6 = math.absf %5 : vector<16x128xf32>
    %c0_4 = arith.constant 0 : index
    %c0_5 = arith.constant 0 : index
    %7 = vector.load %arg4[%c0_4, %c0_5] : memref<8x128xf32, #tpu.memory_space<vmem>>, vector<8x128xf32>
    %8 = vector.shape_cast %6 : vector<16x128xf32> to vector<2x8x128xf32>
    %cst = arith.constant dense<0.000000e+00> : vector<8x128xf32>
    %9 = vector.multi_reduction <add>, %8, %cst [0] : vector<2x8x128xf32> to vector<8x128xf32>
    %10 = arith.addf %7, %9 : vector<8x128xf32>
    %c0_6 = arith.constant 0 : index
    %c0_7 = arith.constant 0 : index
    %11 = vector.load %arg4[%c0_6, %c0_7] : memref<8x128xf32, #tpu.memory_space<vmem>>, vector<8x128xf32>
    tpu.vector_store %arg4[%c0_6, %c0_7], %10 {strides = array<i32>} : memref<8x128xf32, #tpu.memory_space<vmem>>, vector<8x128xf32>,
    %c0_i32_8 = arith.constant 0 : i32
    %12 = arith.cmpi eq, %arg0, %c0_i32_8 : i32
    %13 = arith.extui %12 : i1 to i32
    %c0_i32_9 = arith.constant 0 : i32
    %14 = arith.cmpi ne, %13, %c0_i32_9 : i32
    scf.if %14 {
      %c0_10 = arith.constant 0 : index
      %c0_11 = arith.constant 0 : index
      %15 = vector.load %arg4[%c0_10, %c0_11] : memref<8x128xf32, #tpu.memory_space<vmem>>, vector<8x128xf32>
      %cst_12 = arith.constant dense<0.000000e+00> : vector<128xf32>
      %16 = vector.multi_reduction <add>, %15, %cst_12 [0] : vector<8x128xf32> to vector<128xf32>
      %17 = vector.shape_cast %16 : vector<128xf32> to vector<1x128xf32>
      %c0_13 = arith.constant 0 : index
      %c0_14 = arith.constant 0 : index
      %18 = vector.load %arg3[%c0_13, %c0_14] : memref<1x128xf32, #tpu.memory_space<vmem>>, vector<1x128xf32>
      tpu.vector_store %arg3[%c0_13, %c0_14], %17 {strides = array<i32>} : memref<1x128xf32, #tpu.memory_space<vmem>>, vector<1x128xf32>,
    } else {
    }
    return
  }
  func.func @transform_0(%arg0: i32) -> (i32, i32) {
    %c0_i32 = arith.constant 0 : i32
    %c0_i32_0 = arith.constant 0 : i32
    return %arg0, %c0_i32 : i32, i32
  }
  func.func @transform_1(%arg0: i32) -> (i32, i32) {
    %c0_i32 = arith.constant 0 : i32
    %c0_i32_0 = arith.constant 0 : i32
    return %arg0, %c0_i32 : i32, i32
  }
  func.func @transform_2(%arg0: i32) -> (i32, i32) {
    %c0_i32 = arith.constant 0 : i32
    %c0_i32_0 = arith.constant 0 : i32
    %c0_i32_1 = arith.constant 0 : i32
    return %c0_i32, %c0_i32_0 : i32, i32
  }
}

</mosaic_0001>

<llo_original>
// kernel: l1_loss.1
$region0: #{l1_loss.1}
  #allocation0 [shape = 'u32[]', space=smem, size = 0x4, offset = 0x4, fixed_abs, tag = 'smem constant byte address 0x4 - core index']
  #allocation1 [shape = 'u32[72,128]{1,0:T(1,128)}', space=vmem, size = 0x9000, scoped, tag = 'internal scratch']
  #allocation2 [shape = 'f32[8,128]{1,0:T(8,128)}', space=vmem, size = 0x1000, scoped, tag = 'scratch operand']
  %s0 = inlined_call_operand.vmem [shape: f32[16,128], index: 0, kind: input, shape index: {}]
  %s1 = inlined_call_operand.vmem [shape: f32[16,128], index: 1, kind: input, shape index: {}]
  %s2 = inlined_call_operand.vmem [shape: f32[1,128], index: 2, kind: output, shape index: {}]
  %s3 = sld [smem:[#allocation0]]
  $region26: #{l1_loss.1} parent=0
    _
  %s5 = ssub.s32 1, %s3
  %s6 = scalar_select 0, %s5, %s3
  // Predicated region
  $region2: #{l1_loss.1} parent=0 // pred_check
    _
  $region3: #{l1_loss.1} parent=0 // pred_check_branch
    %8 = sbr.rel (0) target = $region5
  $region4: #{l1_loss.1} parent=0 // pred_region
    _
  $region5: #{l1_loss.1} parent=0 // pred_fallthru
    _
  // Predicated region
  $region6: #{l1_loss.1} parent=0 // pred_check
    _
  $region7: #{l1_loss.1} parent=0 // pred_check_branch
    %10 = sbr.rel (0) target = $region9
  $region8: #{l1_loss.1} parent=0 // pred_region
    _
  $region9: #{l1_loss.1} parent=0 // pred_fallthru
    _
  %p11 = scmp.eq.s32.totalorder 0, 0
  // Predicated region
  $region10: #{l1_loss.1} parent=0 // pred_check
    %p12 = pneg %p11
  $region11: #{l1_loss.1} parent=0 // pred_check_branch
    %14 = sbr.rel (%p12) target = $region13
  $region12: #{l1_loss.1} parent=0 // pred_region
    %15 = vst [vmem:[#allocation2] sm:$0xff] 0.0
  $region13: #{l1_loss.1} parent=0 // pred_fallthru
    _
  %v16 = vld [vmem:[%s0] sm:$0xff]
  %v17 = vld [vmem:[%s0 + $0x8] sm:$0xff]
  %v18 = vld [vmem:[%s1] sm:$0xff]
  %v19 = vld [vmem:[%s1 + $0x8] sm:$0xff]
  %v20 = vsub.f32 %v16, %v18
  %v21 = vsub.f32 %v17, %v19
  %v22 = vand.u32 2147483647, %v20
  %v23 = vand.u32 2147483647, %v21
  %v24 = vld [vmem:[#allocation2] sm:$0xff]
  %v25 = vadd.f32 %v22, %v23
  %v26 = vadd.f32 %v24, %v25
  %27 = vst [vmem:[#allocation2] sm:$0xff] %v26
  // Predicated region
  $region14: #{l1_loss.1} parent=0 // pred_check
    %p28 = pneg %p11
  $region15: #{l1_loss.1} parent=0 // pred_check_branch
    %30 = sbr.rel (%p28) target = $region17
  $region16: #{l1_loss.1} parent=0 // pred_region
    %v31 = vld [vmem:[#allocation2] sm:$0xff]
    %v32 = vrot.slane %v31, 4
    %v33 = vadd.f32 %v31, %v32
    %v34 = vrot.slane %v33, 2
    %v35 = vadd.f32 %v33, %v34
    %v36 = vrot.slane %v35, 1
    %v37 = vadd.f32 %v35, %v36
    %38 = vst [vmem:[%s2] sm:$0x1] %v37
  $region17: #{l1_loss.1} parent=0 // pred_fallthru
    _
  // Predicated region
  $region18: #{l1_loss.1} parent=0 // pred_check
    _
  $region19: #{l1_loss.1} parent=0 // pred_check_branch
    %40 = sbr.rel (0) target = $region21
  $region20: #{l1_loss.1} parent=0 // pred_region
    _
  $region21: #{l1_loss.1} parent=0 // pred_fallthru
    _
  // Predicated region
  $region22: #{l1_loss.1} parent=0 // pred_check
    _
  $region23: #{l1_loss.1} parent=0 // pred_check_branch
    %42 = sbr.rel (0) target = $region25
  $region24: #{l1_loss.1} parent=0 // pred_region
    _
  $region25: #{l1_loss.1} parent=0 // pred_fallthru
    _

</llo_original>
